<compile_context>
chip_gen: v7x
topology: tpu7x:2x2x1
jax: 0.10.0
libtpu: 0.0.40
codegen_flags: <defaults>
</compile_context>

<pallas_src>
import math

import jax
import jax.numpy as jnp
from jax.experimental import pallas as pl
from jax.experimental.pallas import tpu as pltpu


def positional_embedding_table(num_pos, d_model):
    """Replicates PositionalEmbedding's sin/cos table (rows 0..num_pos-1)."""
    position = jnp.arange(num_pos, dtype=jnp.float32)[:, None]            # [P, 1]
    div_term = jnp.exp(
        jnp.arange(0, d_model, 2, dtype=jnp.float32)
        * -(math.log(10000.0) / d_model)
    )                                                                      # [d_model/2]
    pe = jnp.zeros((num_pos, d_model), dtype=jnp.float32)
    pe = pe.at[:, 0::2].set(jnp.sin(position * div_term))
    pe = pe.at[:, 1::2].set(jnp.cos(position * div_term))
    return pe


def _patch_embed_kernel(x_ref, w_ref, pe_ref, o_ref):
    # x_ref:  (tn, kp)  `pack` consecutive patches per row
    # w_ref:  (kp, dp)  block-diagonal value-embedding weight (VMEM resident)
    # pe_ref: (tn, dp)  positional embedding pre-tiled to the row tile (resident)
    # o_ref:  (tn, dp)  lane-dense packed output
    o_ref[...] = (
        jnp.dot(x_ref[...], w_ref[...], preferred_element_type=jnp.float32)
        + pe_ref[...]
    ).astype(o_ref.dtype)


def patch_embedding(x, w_value, *, d_model, patch_len, stride, padding):
    """x: [B, n_vars, L] float -> ([B*n_vars, P, d_model] float32, n_vars)."""
    B, n_vars, L = x.shape

    # --- ReplicationPad1d((0, padding)) + unfold: pure data movement in XLA ---
    if padding > 0:
        x = jnp.concatenate([x, jnp.repeat(x[:, :, -1:], padding, axis=-1)], axis=-1)
    Lp = x.shape[-1]
    P = (Lp - patch_len) // stride + 1
    idx = jnp.arange(P)[:, None] * stride + jnp.arange(patch_len)[None, :]  # [P, patch_len]
    patches = x[:, :, idx]                                  # [B, n_vars, P, patch_len]
    BN = B * n_vars
    patches = patches.reshape(BN, P, patch_len).astype(jnp.float32)

    # --- lane-dense packing: `pack` patches per row so the output row is
    #     pack*d_model (ideally 128) lanes wide -> full vst stores ---
    pack = 1
    if d_model < 128:
        for c in range(min(128 // max(d_model, 1), P), 0, -1):
            if P % c == 0:
                pack = c
                break
    pp = P // pack                       # packed rows per sequence
    kp = pack * patch_len                # packed contraction dim
    dp = pack * d_model                  # packed output lane width

    x2 = patches.reshape(BN * pp, kp)    # byte-identical row-major regrouping

    # block-diagonal weight: packed_row @ wbd == per-patch (patch @ W.T), concatenated
    wt = jnp.asarray(w_value, jnp.float32).T                # [patch_len, d_model]
    wbd = jnp.zeros((kp, dp), jnp.float32)
    for j in range(pack):
        wbd = wbd.at[j * patch_len:(j + 1) * patch_len,
                     j * d_model:(j + 1) * d_model].set(wt)

    pe_packed = positional_embedding_table(P, d_model).reshape(pp, dp)

    # --- row-tile selection: ~512 packed rows per step, >=8 grid steps when that
    #     does not starve the tile, row count per tile a multiple of 8 ---
    tb = max(1, 512 // pp)               # sequences per tile
    tb = min(tb, BN)
    cap = max(1, -(-BN // 8))            # cap so the grid keeps ~8 steps ...
    if cap * pp >= 8:                    # ... unless that shrinks tiles below 8 rows
        tb = min(tb, cap)
    step = 8 // math.gcd(pp, 8)          # tn = tb*pp must be a multiple of 8
    tb = -(-tb // step) * step
    grid = -(-BN // tb)
    bn_pad = grid * tb
    tn = tb * pp

    r, r_pad = BN * pp, bn_pad * pp
    if r_pad != r:                       # pad whole zero sequences; sliced off below
        x2 = jnp.pad(x2, ((0, r_pad - r), (0, 0)))

    pe_tile = jnp.tile(pe_packed, (tb, 1))                  # (tn, dp), VMEM resident

    out2 = pl.pallas_call(
        _patch_embed_kernel,
        out_shape=jax.ShapeDtypeStruct((r_pad, dp), jnp.float32),
        grid_spec=pl.GridSpec(
            grid=(grid,),
            in_specs=[
                pl.BlockSpec((tn, kp), lambda i: (i, 0)),   # patches (tiled rows)
                pl.BlockSpec((kp, dp), lambda i: (0, 0)),   # weight (resident)
                pl.BlockSpec((tn, dp), lambda i: (0, 0)),   # pos-emb (resident)
            ],
            out_specs=pl.BlockSpec((tn, dp), lambda i: (i, 0)),
        ),
        compiler_params=pltpu.CompilerParams(
            dimension_semantics=("parallel",),
        ),
        cost_estimate=pl.CostEstimate(
            flops=2 * r_pad * kp * dp,
            transcendentals=0,
            bytes_accessed=4 * (r_pad * kp + r_pad * dp + kp * dp + tn * dp),
        ),
    )(x2, wbd, pe_tile)

    out = out2[:r].reshape(BN, P, d_model)
    # TODO(synk): nn.Dropout is treated as identity (inference); training-mode
    # dropout (pltpu.prng_*) not implemented here.
    return out, n_vars


def patch_embedding_ref(x, w_value, *, d_model, patch_len, stride, padding):
    """Pure-JAX reference with full-precision matmul (same math as PyTorch forward)."""
    B, n_vars, L = x.shape
    if padding > 0:
        x = jnp.concatenate([x, jnp.repeat(x[:, :, -1:], padding, axis=-1)], axis=-1)
    P = (x.shape[-1] - patch_len) // stride + 1
    idx = jnp.arange(P)[:, None] * stride + jnp.arange(patch_len)[None, :]
    patches = x[:, :, idx].reshape(B * n_vars, P, patch_len).astype(jnp.float32)
    pe = positional_embedding_table(P, d_model)
    out = jnp.einsum("npk,dk->npd", patches, jnp.asarray(w_value, jnp.float32),
                     precision=jax.lax.Precision.HIGHEST) + pe[None]
    return out, n_vars


if __name__ == "__main__":
    # Small shapes consistent with the module: x is [batch, n_vars, seq_len].
    B, n_vars, L = 2, 4, 16
    d_model, patch_len, stride, padding = 32, 8, 4, 4

    key = jax.random.PRNGKey(0)
    kx, kw = jax.random.split(key)
    x = jax.random.normal(kx, (B, n_vars, L), dtype=jnp.float32)
    bound = 1.0 / math.sqrt(patch_len)          # nn.Linear default init range
    w_value = jax.random.uniform(kw, (d_model, patch_len), jnp.float32, -bound, bound)

    out, nv = patch_embedding(x, w_value, d_model=d_model, patch_len=patch_len,
                              stride=stride, padding=padding)
    out = jax.block_until_ready(out)

    ref, nv_ref = patch_embedding_ref(x, w_value, d_model=d_model, patch_len=patch_len,
                                      stride=stride, padding=padding)
    P = (L + padding - patch_len) // stride + 1
    assert nv == n_vars == nv_ref
    assert out.shape == (B * n_vars, P, d_model)
    # Tolerance accounts for MXU default (bf16-pass) matmul precision vs the
    # HIGHEST-precision f32 reference; layout/PE bugs would be O(0.1-1) errors.
    assert jnp.allclose(out, ref, atol=2e-2, rtol=1e-3), float(jnp.max(jnp.abs(out - ref)))
    print("KERNEL_OK")
</pallas_src>

<mosaic_0001>
module attributes {stable_mosaic.version = 11 : i64} {
  func.func @_patch_embed_kernel(%arg0: i32, %arg1: memref<8x32xf32, #tpu.memory_space<vmem>>, %arg2: memref<32x128xf32, #tpu.memory_space<vmem>>, %arg3: memref<8x128xf32, #tpu.memory_space<vmem>>, %arg4: memref<8x128xf32, #tpu.memory_space<vmem>>) attributes {dimension_semantics = [#tpu.dimension_semantics<parallel>], iteration_bounds = array<i64: 1>, scalar_prefetch = 0 : i64, scratch_operands = 0 : i64, tpu.core_type = #tpu.core_type<tc>, window_params = [{transform_indices = @transform_0, window_bounds = array<i64: 8, 32>}, {pipeline_mode = #tpu.pipeline_mode<synchronous>, transform_indices = @transform_1, window_bounds = array<i64: 32, 128>}, {pipeline_mode = #tpu.pipeline_mode<synchronous>, transform_indices = @transform_2, window_bounds = array<i64: 8, 128>}, {transform_indices = @transform_3, window_bounds = array<i64: 8, 128>}]} {
    %c0 = arith.constant 0 : index
    %c0_0 = arith.constant 0 : index
    %0 = vector.load %arg1[%c0, %c0_0] : memref<8x32xf32, #tpu.memory_space<vmem>>, vector<8x32xf32>
    %c0_1 = arith.constant 0 : index
    %c0_2 = arith.constant 0 : index
    %1 = vector.load %arg2[%c0_1, %c0_2] : memref<32x128xf32, #tpu.memory_space<vmem>>, vector<32x128xf32>
    %cst = arith.constant dense<0.000000e+00> : vector<8x128xf32>
    %2 = tpu.matmul %0, %1, %cst {dimension_numbers = #tpu.dot_dimension_numbers<[1], [0], [0], [1], [0, 0, 1, 1], [], []>} : vector<8x32xf32>, vector<32x128xf32>, vector<8x128xf32> -> vector<8x128xf32>
    %c0_3 = arith.constant 0 : index
    %c0_4 = arith.constant 0 : index
    %3 = vector.load %arg3[%c0_3, %c0_4] : memref<8x128xf32, #tpu.memory_space<vmem>>, vector<8x128xf32>
    %4 = arith.addf %2, %3 : vector<8x128xf32>
    %c0_5 = arith.constant 0 : index
    %c0_6 = arith.constant 0 : index
    %5 = vector.load %arg4[%c0_5, %c0_6] : memref<8x128xf32, #tpu.memory_space<vmem>>, vector<8x128xf32>
    tpu.vector_store %arg4[%c0_5, %c0_6], %4 {strides = array<i32>} : memref<8x128xf32, #tpu.memory_space<vmem>>, vector<8x128xf32>,
    return
  }
  func.func @transform_0(%arg0: i32) -> (i32, i32) {
    %c0_i32 = arith.constant 0 : i32
    %c0_i32_0 = arith.constant 0 : i32
    return %arg0, %c0_i32 : i32, i32
  }
  func.func @transform_1(%arg0: i32) -> (i32, i32) {
    %c0_i32 = arith.constant 0 : i32
    %c0_i32_0 = arith.constant 0 : i32
    %c0_i32_1 = arith.constant 0 : i32
    return %c0_i32, %c0_i32_0 : i32, i32
  }
  func.func @transform_2(%arg0: i32) -> (i32, i32) {
    %c0_i32 = arith.constant 0 : i32
    %c0_i32_0 = arith.constant 0 : i32
    %c0_i32_1 = arith.constant 0 : i32
    return %c0_i32, %c0_i32_0 : i32, i32
  }
  func.func @transform_3(%arg0: i32) -> (i32, i32) {
    %c0_i32 = arith.constant 0 : i32
    %c0_i32_0 = arith.constant 0 : i32
    return %arg0, %c0_i32 : i32, i32
  }
}

</mosaic_0001>

<llo_original>
// kernel: tpu_custom_call.1
$region0: #{tpu_custom_call.1}
  #allocation0 [shape = 'u32[]', space=smem, size = 0x4, offset = 0x4, fixed_abs, tag = 'smem constant byte address 0x4 - core index']
  #allocation1 [shape = 'u32[144,128]{1,0:T(1,128)}', space=vmem, size = 0x12000, scoped, tag = 'internal scratch']
  %s0 = inlined_call_operand.hbm [shape: f32[8,32], index: 0, kind: input, shape index: {}]
  %s1 = inlined_call_operand.hbm [shape: f32[32,128], index: 1, kind: input, shape index: {}]
  %s2 = inlined_call_operand.hbm [shape: f32[8,128], index: 2, kind: input, shape index: {}]
  %s3 = inlined_call_operand.hbm [shape: f32[8,128], index: 3, kind: output, shape index: {}]
  %s4 = sld [smem:[#allocation0]]
  $region34: #{tpu_custom_call.1} parent=0
    _
  %s6 = ssub.s32 1, %s4
  %s7 = scalar_select 0, %s6, %s4
  $region1: #{tpu_custom_call.1} parent=0
    #allocation2 [shape = 'u8[4096]{0}', space=vmem, size = 0x1000, scoped, tag = 'input window, operand 0, single buffered']
    #allocation3 [shape = 's32[1]{0}', space=sflag, size = 0x4, scoped, tag = 'scoped memory for tpu_custom_call.1']
    #allocation4 [shape = 's32[1]{0}', space=sflag, size = 0x4, scoped, tag = 'scoped memory for tpu_custom_call.1']
    #allocation5 [shape = 'u8[16384]{0}', space=vmem, size = 0x4000, scoped, tag = 'input window, operand 1, single buffered']
    #allocation6 [shape = 's32[1]{0}', space=sflag, size = 0x4, scoped, tag = 'scoped memory for tpu_custom_call.1']
    #allocation7 [shape = 'u8[4096]{0}', space=vmem, size = 0x1000, scoped, tag = 'input window, operand 2, single buffered']
    #allocation8 [shape = 'u8[4096]{0}', space=vmem, size = 0x1000, scoped, tag = 'output window, operand 0, single buffered']
    %8 = vsyncpa [#allocation3], 0
    %9 = vsyncpa [#allocation6], 0
    %10 = vsyncpa [#allocation4], 0
    // Predicated region
    $region2: #{tpu_custom_call.1} parent=1 // pred_check
      _
    $region3: #{tpu_custom_call.1} parent=1 // pred_check_branch
      %12 = sbr.rel (0) target = $region5
    $region4: #{tpu_custom_call.1} parent=1 // pred_region
      %s14 = ssub.s32 128, 128
      %15 = vsyncadd [#allocation3], %s14
      %s17 = sshll.u32 [#allocation2], 4
      %s18 = int_to_ptr.vmem [resolvable:$true] %s17
      %20 = dma.hbm_to_vmem [thread:$0]  %s0, 128, %s18, [#allocation3]
    $region5: #{tpu_custom_call.1} parent=1 // pred_fallthru
      _
    // Predicated region
    $region6: #{tpu_custom_call.1} parent=1 // pred_check
      _
    $region7: #{tpu_custom_call.1} parent=1 // pred_check_branch
      %22 = sbr.rel (0) target = $region9
    $region8: #{tpu_custom_call.1} parent=1 // pred_region
      %s24 = ssub.s32 512, 512
      %25 = vsyncadd [#allocation6], %s24
      %s26 = sshll.u32 [#allocation5], 4
      %s27 = int_to_ptr.vmem [resolvable:$true] %s26
      %32 = dma.hbm_to_vmem [thread:$0]  %s1, 512, %s27, [#allocation6], 128, 128, 8
    $region9: #{tpu_custom_call.1} parent=1 // pred_fallthru
      _
    // Predicated region
    $region10: #{tpu_custom_call.1} parent=1 // pred_check
      _
    $region11: #{tpu_custom_call.1} parent=1 // pred_check_branch
      %34 = sbr.rel (0) target = $region13
    $region12: #{tpu_custom_call.1} parent=1 // pred_region
      %s36 = ssub.s32 128, 128
      %37 = vsyncadd [#allocation6], %s36
      %s39 = sshll.u32 [#allocation7], 4
      %s40 = int_to_ptr.vmem [resolvable:$true] %s39
      %42 = dma.hbm_to_vmem [thread:$0]  %s2, 128, %s40, [#allocation6]
    $region13: #{tpu_custom_call.1} parent=1 // pred_fallthru
      _
    // Predicated region
    $region14: #{tpu_custom_call.1} parent=1 // pred_check
      _
    $region15: #{tpu_custom_call.1} parent=1 // pred_check_branch
      %44 = sbr.rel (0) target = $region17
    $region16: #{tpu_custom_call.1} parent=1 // pred_region
      %45 = dma.done [#allocation3], 128
    $region17: #{tpu_custom_call.1} parent=1 // pred_fallthru
      _
    // Predicated region
    $region18: #{tpu_custom_call.1} parent=1 // pred_check
      _
    $region19: #{tpu_custom_call.1} parent=1 // pred_check_branch
      %47 = sbr.rel (0) target = $region21
    $region20: #{tpu_custom_call.1} parent=1 // pred_region
      %48 = dma.done [#allocation6], 512
    $region21: #{tpu_custom_call.1} parent=1 // pred_fallthru
      _
    // Predicated region
    $region22: #{tpu_custom_call.1} parent=1 // pred_check
      _
    $region23: #{tpu_custom_call.1} parent=1 // pred_check_branch
      %50 = sbr.rel (0) target = $region25
    $region24: #{tpu_custom_call.1} parent=1 // pred_region
      %51 = dma.done [#allocation6], 128
    $region25: #{tpu_custom_call.1} parent=1 // pred_fallthru
      _
    %v52 = vld [vmem:[#allocation2] sm:$0xff]
    %v53 = vld [vmem:[#allocation5] sm:$0xff]
    %v54 = vld [vmem:[#allocation5 + $0x8] sm:$0xff]
    %v55 = vld [vmem:[#allocation5 + $0x10] sm:$0xff]
    %v56 = vld [vmem:[#allocation5 + $0x18] sm:$0xff]
    %v57 = vld [vmem:[#allocation7] sm:$0xff]
    %vm58 = vcmask 261120
    %v60 = vsel %vm58, %v52, 0
    %62 = vmatprep.subr.mxu0 0.0
    %63 = vmatpush1.msra.mxu0 %v53
    %64 = vmatprep.subr.mxu0 0.0
    %65 = vmatpush1.msra.mxu0 %v54
    %66 = vmatprep.subr.mxu0 0.0
    %67 = vmatpush1.msra.mxu0 %v55
    %68 = vmatprep.subr.mxu0 0.0
    %69 = vmatpush1.msra.mxu0 %v56
    %70 = vmatprep.subr.mxu0 0.0
    %71 = vmatpush1.msra.mxu0 0.0
    %72 = vmatprep.subr.mxu0 0.0
    %73 = vmatpush1.msra.mxu0 0.0
    %74 = vmatprep.subr.mxu0 0.0
    %75 = vmatpush1.msra.mxu0 0.0
    %76 = vmatprep.subr.mxu0 0.0
    %77 = vmatpush1.msra.mxu0 0.0
    %78 = vmatprep.subr.mxu0 0.0
    %79 = vmatpush1.msra.mxu0 0.0
    %80 = vmatprep.subr.mxu0 0.0
    %81 = vmatpush1.msra.mxu0 0.0
    %82 = vmatprep.subr.mxu0 0.0
    %83 = vmatpush1.msra.mxu0 0.0
    %84 = vmatprep.subr.mxu0 0.0
    %85 = vmatpush1.msra.mxu0 0.0
    %86 = vmatprep.subr.mxu0 0.0
    %87 = vmatpush1.msra.mxu0 0.0
    %88 = vmatprep.subr.mxu0 0.0
    %89 = vmatpush1.msra.mxu0 0.0
    %90 = vmatprep.subr.mxu0 0.0
    %91 = vmatpush1.msra.mxu0 0.0
    %92 = vmatprep.subr.mxu0 0.0
    %93 = vmatpush1.msra.mxu0 0.0
    %94 = vmatprep.subr.mxu0 0.0
    %95 = vmatpush1.msra.mxu0 0.0
    %96 = vmatprep.subr.mxu0 0.0
    %97 = vmatpush1.msra.mxu0 0.0
    %98 = vmatprep.subr.mxu0 0.0
    %99 = vmatpush1.msra.mxu0 0.0
    %100 = vmatprep.subr.mxu0 0.0
    %101 = vmatpush1.msra.mxu0 0.0
    %102 = vmatprep.subr.mxu0 0.0
    %103 = vmatpush1.msra.mxu0 0.0
    %104 = vmatprep.subr.mxu0 0.0
    %105 = vmatpush1.msra.mxu0 0.0
    %106 = vmatprep.subr.mxu0 0.0
    %107 = vmatpush1.msra.mxu0 0.0
    %108 = vmatprep.subr.mxu0 0.0
    %109 = vmatpush1.msra.mxu0 0.0
    %110 = vmatprep.subr.mxu0 0.0
    %111 = vmatpush1.msra.mxu0 0.0
    %112 = vmatprep.subr.mxu0 0.0
    %113 = vmatpush1.msra.mxu0 0.0
    %114 = vmatprep.subr.mxu0 0.0
    %115 = vmatpush1.msra.mxu0 0.0
    %116 = vmatprep.subr.mxu0 0.0
    %117 = vmatpush1.msra.mxu0 0.0
    %118 = vmatprep.subr.mxu0 0.0
    %119 = vmatpush1.msra.mxu0 0.0
    %120 = vmatprep.subr.mxu0 0.0
    %121 = vmatpush1.msra.mxu0 0.0
    %122 = vmatprep.subr.mxu0 0.0
    %123 = vmatpush1.msra.mxu0 0.0
    %124 = vmatprep.subr.mxu0 0.0
    %125 = vmatpush1.msra.mxu0 0.0
    %126 = vmatprep.mubr.f32.mxu0 0.0
    %127 = vmatmul.mubr.f32.gmra.mrb[0].mxu0 %v60
    %v128 = vpop.f32.mrb[0].mxu0
    %v129 = vadd.f32 %v57, %v128
    %v130 = vpop.f32.mrb[0].mxu0
    %131 = vdwg.mxu0
    %132 = vst [vmem:[#allocation8] sm:$0xff] %v129
    // Predicated region
    $region26: #{tpu_custom_call.1} parent=1 // pred_check
      _
    $region27: #{tpu_custom_call.1} parent=1 // pred_check_branch
      %134 = sbr.rel (0) target = $region29
    $region28: #{tpu_custom_call.1} parent=1 // pred_region
      %s136 = ssub.s32 128, 128
      %137 = vsyncadd [#allocation4], %s136
      %s139 = sshll.u32 [#allocation8], 4
      %s140 = int_to_ptr.vmem [resolvable:$true] %s139
      %142 = dma.vmem_to_hbm [thread:$0]  %s140, 128, %s3, [#allocation4]
    $region29: #{tpu_custom_call.1} parent=1 // pred_fallthru
      _
    // Predicated region
    $region30: #{tpu_custom_call.1} parent=1 // pred_check
      _
    $region31: #{tpu_custom_call.1} parent=1 // pred_check_branch
      %144 = sbr.rel (0) target = $region33
    $region32: #{tpu_custom_call.1} parent=1 // pred_region
      %145 = dma.done [#allocation4], 128
    $region33: #{tpu_custom_call.1} parent=1 // pred_fallthru
      _
    %146 = vsyncpa [#allocation3], 1
    %147 = vsyncpa [#allocation6], 1
    %148 = vsyncpa [#allocation4], 1

</llo_original>
